<compile_context>
chip_gen: v5e
topology: v5e:2x2
jax: 0.10.0
libtpu: 0.0.40
codegen_flags: <defaults>
</compile_context>

<pallas_src>
import functools

import jax
import jax.numpy as jnp
from jax.experimental import pallas as pl
from jax.experimental.pallas import tpu as pltpu

LANE = 128
SUBLANE = 8


def _round_up(n, m):
    return ((n + m - 1) // m) * m


def _fused_mlp_kernel(*refs, n_layers):
    # refs = (x, w0, b0, w1, b1, ..., out)
    x_ref = refs[0]
    wb_refs = refs[1:1 + 2 * n_layers]
    o_ref = refs[1 + 2 * n_layers]

    # Keep the running activation as a value (vregs); Mosaic spills to VMEM
    # only if it has to.  No explicit scratch store/load round-trips.
    h = x_ref[...].astype(jnp.float32)
    for i in range(n_layers):
        w_ref = wb_refs[2 * i]
        b_ref = wb_refs[2 * i + 1]
        h = jnp.dot(h, w_ref[...], preferred_element_type=jnp.float32) + b_ref[...]
    o_ref[...] = h.astype(o_ref.dtype)


def init_mlp_params(key, num_clusters, hidden_sizes):
    """Mirror MLPModel.__init__: sizes = hidden_sizes + [num_clusters], one
    Linear(sizes[i], sizes[i+1]) per consecutive pair (torch default init).
    The forward pass applies them in order with no activation in between."""
    if isinstance(hidden_sizes, int):
        hidden_sizes = [hidden_sizes]
    sizes = list(hidden_sizes) + [num_clusters]
    params = []
    for idx in range(len(sizes) - 1):
        fan_in, fan_out = sizes[idx], sizes[idx + 1]
        key, kw, kb = jax.random.split(key, 3)
        bound = 1.0 / (fan_in ** 0.5)
        w = jax.random.uniform(kw, (fan_out, fan_in), jnp.float32, -bound, bound)
        b = jax.random.uniform(kb, (fan_out,), jnp.float32, -bound, bound)
        params.append((w.T, b))  # store (Din, Dout) = W^T
    return params


def pad_params_for_tpu(params):
    """Zero-pad every layer's input AND output feature dim up to a multiple of
    128 lanes.  Done once, outside the forward pass.  Zero padding keeps the
    matmul results exact for the real rows/columns."""
    padded = []
    in_dim = _round_up(params[0][0].shape[0], LANE)  # first-layer input, padded
    for w_t, b in params:
        din, dout = w_t.shape
        dout_pad = _round_up(dout, LANE)
        w_pad = jnp.zeros((in_dim, dout_pad), jnp.float32)
        w_pad = w_pad.at[:din, :dout].set(w_t)
        b_pad = jnp.zeros((1, dout_pad), jnp.float32).at[0, :dout].set(b)
        padded.append((w_pad, b_pad))
        in_dim = dout_pad  # next layer consumes the padded activation
    return padded


@functools.partial(jax.jit, static_argnames=("out_dim", "block_b"))
def mlp_forward(x, padded_params, *, out_dim, block_b=128):
    n_layers = len(padded_params)
    B, din = x.shape
    din_pad = padded_params[0][0].shape[0]

    # Pad input features to the lane-dense width the first weight expects.
    if din_pad != din:
        x = jnp.pad(x, ((0, 0), (0, din_pad - din)))

    # Batch tiling: tile size multiple of 8 sublanes, grid over batch only.
    tb = min(_round_up(block_b, SUBLANE), _round_up(B, SUBLANE))
    b_pad = _round_up(B, tb)
    if b_pad != B:
        x = jnp.pad(x, ((0, b_pad - B), (0, 0)))

    out_pad = padded_params[-1][0].shape[1]

    in_specs = [pl.BlockSpec((tb, din_pad), lambda i: (i, 0))]
    flat_wb = []
    for (w, b) in padded_params:
        in_specs.append(pl.BlockSpec(w.shape, lambda i: (0, 0)))  # VMEM-resident
        in_specs.append(pl.BlockSpec(b.shape, lambda i: (0, 0)))  # VMEM-resident
        flat_wb.extend([w, b])

    out_specs = pl.BlockSpec((tb, out_pad), lambda i: (i, 0))

    y = pl.pallas_call(
        functools.partial(_fused_mlp_kernel, n_layers=n_layers),
        out_shape=jax.ShapeDtypeStruct((b_pad, out_pad), x.dtype),
        grid_spec=pltpu.PrefetchScalarGridSpec(
            num_scalar_prefetch=0,
            grid=(b_pad // tb,),
            in_specs=in_specs,
            out_specs=out_specs,
        ),
        compiler_params=pltpu.CompilerParams(
            dimension_semantics=("parallel",),
        ),
    )(x, *flat_wb)

    # Slice away batch + lane padding.
    return y[:B, :out_dim]


if __name__ == "__main__":
    key = jax.random.PRNGKey(0)
    key, kx = jax.random.split(key)

    # MLPModel(num_clusters=16, hidden_sizes=[32, 64]) ->
    #   Linear(32, 64), Linear(64, 16)  (no activations, per the forward pass)
    num_clusters = 16
    hidden_sizes = [32, 64]
    batch = 8

    params = init_mlp_params(key, num_clusters, hidden_sizes)
    padded_params = pad_params_for_tpu(params)
    x = jax.random.normal(kx, (batch, hidden_sizes[0]), jnp.float32)

    out = mlp_forward(x, padded_params, out_dim=num_clusters)
    jax.block_until_ready(out)

    # Pure-JAX reference check against the unpadded parameters.
    ref = x
    for w_t, b in params:
        ref = ref @ w_t + b
    assert out.shape == (batch, num_clusters)
    assert jnp.allclose(out, ref, atol=1e-5, rtol=1e-5)

    print("KERNEL_OK")
</pallas_src>

<mosaic_0001>
module attributes {stable_mosaic.version = 11 : i64} {
  func.func @_fused_mlp_kernel(%arg0: i32, %arg1: memref<8x128xf32, #tpu.memory_space<vmem>>, %arg2: memref<128x128xf32, #tpu.memory_space<vmem>>, %arg3: memref<1x128xf32, #tpu.memory_space<vmem>>, %arg4: memref<128x128xf32, #tpu.memory_space<vmem>>, %arg5: memref<1x128xf32, #tpu.memory_space<vmem>>, %arg6: memref<8x128xf32, #tpu.memory_space<vmem>>) attributes {dimension_semantics = [#tpu.dimension_semantics<parallel>], iteration_bounds = array<i64: 1>, scalar_prefetch = 0 : i64, scratch_operands = 0 : i64, tpu.core_type = #tpu.core_type<tc>, window_params = [{transform_indices = @transform_0, window_bounds = array<i64: 8, 128>}, {pipeline_mode = #tpu.pipeline_mode<synchronous>, transform_indices = @transform_1, window_bounds = array<i64: 128, 128>}, {pipeline_mode = #tpu.pipeline_mode<synchronous>, transform_indices = @transform_2, window_bounds = array<i64: 1, 128>}, {pipeline_mode = #tpu.pipeline_mode<synchronous>, transform_indices = @transform_3, window_bounds = array<i64: 128, 128>}, {pipeline_mode = #tpu.pipeline_mode<synchronous>, transform_indices = @transform_4, window_bounds = array<i64: 1, 128>}, {transform_indices = @transform_5, window_bounds = array<i64: 8, 128>}]} {
    %c0 = arith.constant 0 : index
    %c0_0 = arith.constant 0 : index
    %0 = vector.load %arg1[%c0, %c0_0] : memref<8x128xf32, #tpu.memory_space<vmem>>, vector<8x128xf32>
    %c0_1 = arith.constant 0 : index
    %c0_2 = arith.constant 0 : index
    %1 = vector.load %arg2[%c0_1, %c0_2] : memref<128x128xf32, #tpu.memory_space<vmem>>, vector<128x128xf32>
    %cst = arith.constant dense<0.000000e+00> : vector<8x128xf32>
    %2 = tpu.matmul %0, %1, %cst {dimension_numbers = #tpu.dot_dimension_numbers<[1], [0], [0], [1], [0, 0, 1, 1], [], []>} : vector<8x128xf32>, vector<128x128xf32>, vector<8x128xf32> -> vector<8x128xf32>
    %c0_3 = arith.constant 0 : index
    %c0_4 = arith.constant 0 : index
    %3 = vector.load %arg3[%c0_3, %c0_4] : memref<1x128xf32, #tpu.memory_space<vmem>>, vector<1x128xf32>
    %4 = vector.broadcast %3 : vector<1x128xf32> to vector<8x128xf32>
    %5 = arith.addf %2, %4 : vector<8x128xf32>
    %c0_5 = arith.constant 0 : index
    %c0_6 = arith.constant 0 : index
    %6 = vector.load %arg4[%c0_5, %c0_6] : memref<128x128xf32, #tpu.memory_space<vmem>>, vector<128x128xf32>
    %cst_7 = arith.constant dense<0.000000e+00> : vector<8x128xf32>
    %7 = tpu.matmul %5, %6, %cst_7 {dimension_numbers = #tpu.dot_dimension_numbers<[1], [0], [0], [1], [0, 0, 1, 1], [], []>} : vector<8x128xf32>, vector<128x128xf32>, vector<8x128xf32> -> vector<8x128xf32>
    %c0_8 = arith.constant 0 : index
    %c0_9 = arith.constant 0 : index
    %8 = vector.load %arg5[%c0_8, %c0_9] : memref<1x128xf32, #tpu.memory_space<vmem>>, vector<1x128xf32>
    %9 = vector.broadcast %8 : vector<1x128xf32> to vector<8x128xf32>
    %10 = arith.addf %7, %9 : vector<8x128xf32>
    %c0_10 = arith.constant 0 : index
    %c0_11 = arith.constant 0 : index
    %11 = vector.load %arg6[%c0_10, %c0_11] : memref<8x128xf32, #tpu.memory_space<vmem>>, vector<8x128xf32>
    tpu.vector_store %arg6[%c0_10, %c0_11], %10 {strides = array<i32>} : memref<8x128xf32, #tpu.memory_space<vmem>>, vector<8x128xf32>,
    return
  }
  func.func @transform_0(%arg0: i32) -> (i32, i32) {
    %c0_i32 = arith.constant 0 : i32
    %c0_i32_0 = arith.constant 0 : i32
    return %arg0, %c0_i32 : i32, i32
  }
  func.func @transform_1(%arg0: i32) -> (i32, i32) {
    %c0_i32 = arith.constant 0 : i32
    %c0_i32_0 = arith.constant 0 : i32
    %c0_i32_1 = arith.constant 0 : i32
    return %c0_i32, %c0_i32_0 : i32, i32
  }
  func.func @transform_2(%arg0: i32) -> (i32, i32) {
    %c0_i32 = arith.constant 0 : i32
    %c0_i32_0 = arith.constant 0 : i32
    %c0_i32_1 = arith.constant 0 : i32
    return %c0_i32, %c0_i32_0 : i32, i32
  }
  func.func @transform_3(%arg0: i32) -> (i32, i32) {
    %c0_i32 = arith.constant 0 : i32
    %c0_i32_0 = arith.constant 0 : i32
    %c0_i32_1 = arith.constant 0 : i32
    return %c0_i32, %c0_i32_0 : i32, i32
  }
  func.func @transform_4(%arg0: i32) -> (i32, i32) {
    %c0_i32 = arith.constant 0 : i32
    %c0_i32_0 = arith.constant 0 : i32
    %c0_i32_1 = arith.constant 0 : i32
    return %c0_i32, %c0_i32_0 : i32, i32
  }
  func.func @transform_5(%arg0: i32) -> (i32, i32) {
    %c0_i32 = arith.constant 0 : i32
    %c0_i32_0 = arith.constant 0 : i32
    return %arg0, %c0_i32 : i32, i32
  }
}

</mosaic_0001>

<llo_original>
// kernel: mlp_forward.1
$region0: #{mlp_forward.1}
  #allocation0 [shape = 'u32[]', space=smem, size = 0x4, offset = 0x4, fixed_abs, tag = 'smem constant byte address 0x4 - core index']
  #allocation1 [shape = 'u32[72,128]{1,0:T(1,128)}', space=vmem, size = 0x9000, scoped, tag = 'internal scratch']
  %s0 = inlined_call_operand.vmem [shape: f32[8,128], index: 0, kind: input, shape index: {}]
  %s1 = inlined_call_operand.hbm [shape: f32[128,128], index: 1, kind: input, shape index: {}]
  %s2 = inlined_call_operand.vmem [shape: f32[1,128], index: 2, kind: input, shape index: {}]
  %s3 = inlined_call_operand.hbm [shape: f32[128,128], index: 3, kind: input, shape index: {}]
  %s4 = inlined_call_operand.vmem [shape: f32[1,128], index: 4, kind: input, shape index: {}]
  %s5 = inlined_call_operand.hbm [shape: f32[8,128], index: 5, kind: output, shape index: {}]
  %s6 = sld [smem:[#allocation0]]
  $region38: #{mlp_forward.1} parent=0
    _
  %s8 = ssub.s32 1, %s6
  %s9 = scalar_select 0, %s8, %s6
  $region1: #{mlp_forward.1} parent=0
    #allocation2 [shape = 'u8[65536]{0}', space=vmem, size = 0x10000, scoped, tag = 'input window, operand 1, single buffered']
    #allocation3 [shape = 's32[1]{0}', space=sflag, size = 0x4, scoped, tag = 'scoped memory for mlp_forward.1']
    #allocation4 [shape = 's32[1]{0}', space=sflag, size = 0x4, scoped, tag = 'scoped memory for mlp_forward.1']
    #allocation5 [shape = 'u8[65536]{0}', space=vmem, size = 0x10000, scoped, tag = 'input window, operand 3, single buffered']
    #allocation6 [shape = 's32[1]{0}', space=sflag, size = 0x4, scoped, tag = 'scoped memory for mlp_forward.1']
    #allocation7 [shape = 'u8[4096]{0}', space=vmem, size = 0x1000, scoped, tag = 'output window, operand 0, single buffered']
    %10 = vsyncpa [#allocation3], 0
    %11 = vsyncpa [#allocation6], 0
    %12 = vsyncpa [#allocation4], 0
    // Predicated region
    $region2: #{mlp_forward.1} parent=1 // pred_check
      _
    $region3: #{mlp_forward.1} parent=1 // pred_check_branch
      %14 = sbr.rel (0) target = $region5
    $region4: #{mlp_forward.1} parent=1 // pred_region
      _
    $region5: #{mlp_forward.1} parent=1 // pred_fallthru
      _
    // Predicated region
    $region6: #{mlp_forward.1} parent=1 // pred_check
      _
    $region7: #{mlp_forward.1} parent=1 // pred_check_branch
      %16 = sbr.rel (0) target = $region9
    $region8: #{mlp_forward.1} parent=1 // pred_region
      %18 = vsyncadd [#allocation3], 0
      %s19 = sshll.u32 %s1, 4
      %s20 = int_to_ptr.hbm [resolvable:$true] %s19
      %s21 = sshll.u32 [#allocation2], 4
      %s22 = int_to_ptr.vmem [resolvable:$true] %s21
      %27 = dma.hbm_to_vmem [thread:$0]  %s20, 2048, %s22, [#allocation3], 128, 128, 8
    $region9: #{mlp_forward.1} parent=1 // pred_fallthru
      _
    // Predicated region
    $region10: #{mlp_forward.1} parent=1 // pred_check
      _
    $region11: #{mlp_forward.1} parent=1 // pred_check_branch
      %29 = sbr.rel (0) target = $region13
    $region12: #{mlp_forward.1} parent=1 // pred_region
      _
    $region13: #{mlp_forward.1} parent=1 // pred_fallthru
      _
    // Predicated region
    $region14: #{mlp_forward.1} parent=1 // pred_check
      _
    $region15: #{mlp_forward.1} parent=1 // pred_check_branch
      %31 = sbr.rel (0) target = $region17
    $region16: #{mlp_forward.1} parent=1 // pred_region
      %33 = vsyncadd [#allocation6], 0
      %s34 = sshll.u32 %s3, 4
      %s35 = int_to_ptr.hbm [resolvable:$true] %s34
      %s36 = sshll.u32 [#allocation5], 4
      %s37 = int_to_ptr.vmem [resolvable:$true] %s36
      %42 = dma.hbm_to_vmem [thread:$0]  %s35, 2048, %s37, [#allocation6], 128, 128, 8
    $region17: #{mlp_forward.1} parent=1 // pred_fallthru
      _
    // Predicated region
    $region18: #{mlp_forward.1} parent=1 // pred_check
      _
    $region19: #{mlp_forward.1} parent=1 // pred_check_branch
      %44 = sbr.rel (0) target = $region21
    $region20: #{mlp_forward.1} parent=1 // pred_region
      _
    $region21: #{mlp_forward.1} parent=1 // pred_fallthru
      _
    // Predicated region
    $region22: #{mlp_forward.1} parent=1 // pred_check
      _
    $region23: #{mlp_forward.1} parent=1 // pred_check_branch
      %46 = sbr.rel (0) target = $region25
    $region24: #{mlp_forward.1} parent=1 // pred_region
      %48 = dma.done [#allocation3], 2048
    $region25: #{mlp_forward.1} parent=1 // pred_fallthru
      _
    // Predicated region
    $region26: #{mlp_forward.1} parent=1 // pred_check
      _
    $region27: #{mlp_forward.1} parent=1 // pred_check_branch
      %50 = sbr.rel (0) target = $region29
    $region28: #{mlp_forward.1} parent=1 // pred_region
      %52 = dma.done [#allocation6], 2048
    $region29: #{mlp_forward.1} parent=1 // pred_fallthru
      _
    %v53 = vld [vmem:[%s0] sm:$0xff]
    %v54 = vld [vmem:[#allocation2] sm:$0xff]
    %v55 = vld [vmem:[#allocation2 + $0x8] sm:$0xff]
    %v56 = vld [vmem:[#allocation2 + $0x10] sm:$0xff]
    %v57 = vld [vmem:[#allocation2 + $0x18] sm:$0xff]
    %v58 = vld [vmem:[#allocation2 + $0x20] sm:$0xff]
    %v59 = vld [vmem:[#allocation2 + $0x28] sm:$0xff]
    %v60 = vld [vmem:[#allocation2 + $0x30] sm:$0xff]
    %v61 = vld [vmem:[#allocation2 + $0x38] sm:$0xff]
    %v62 = vld [vmem:[#allocation2 + $0x40] sm:$0xff]
    %v63 = vld [vmem:[#allocation2 + $0x48] sm:$0xff]
    %v64 = vld [vmem:[#allocation2 + $0x50] sm:$0xff]
    %v65 = vld [vmem:[#allocation2 + $0x58] sm:$0xff]
    %v66 = vld [vmem:[#allocation2 + $0x60] sm:$0xff]
    %v67 = vld [vmem:[#allocation2 + $0x68] sm:$0xff]
    %v68 = vld [vmem:[#allocation2 + $0x70] sm:$0xff]
    %v69 = vld [vmem:[#allocation2 + $0x78] sm:$0xff]
    %v70 = vld [vmem:[%s2] sm:$0x1]
    %v72 = vperm.slane %v70, 0
    %74 = vmatpush.msra.mxu0 %v69
    %75 = vmatpush.msra.mxu0 %v68
    %76 = vmatpush.msra.mxu0 %v67
    %77 = vmatpush.msra.mxu0 %v66
    %78 = vmatpush.msra.mxu0 %v65
    %79 = vmatpush.msra.mxu0 %v64
    %80 = vmatpush.msra.mxu0 %v63
    %81 = vmatpush.msra.mxu0 %v62
    %82 = vmatpush.msra.mxu0 %v61
    %83 = vmatpush.msra.mxu0 %v60
    %84 = vmatpush.msra.mxu0 %v59
    %85 = vmatpush.msra.mxu0 %v58
    %86 = vmatpush.msra.mxu0 %v57
    %87 = vmatpush.msra.mxu0 %v56
    %88 = vmatpush.msra.mxu0 %v55
    %89 = vmatpush.msra.mxu0 %v54
    %90 = vmatmul.f32.gmra.mxu0 %v53
    %v91 = vpop.f32.mrf.mxu0
    %v92 = vadd.f32 %v72, %v91
    %93 = vdwg.mxu0
    %v94 = vld [vmem:[#allocation5] sm:$0xff]
    %v95 = vld [vmem:[#allocation5 + $0x8] sm:$0xff]
    %v96 = vld [vmem:[#allocation5 + $0x10] sm:$0xff]
    %v97 = vld [vmem:[#allocation5 + $0x18] sm:$0xff]
    %v98 = vld [vmem:[#allocation5 + $0x20] sm:$0xff]
    %v99 = vld [vmem:[#allocation5 + $0x28] sm:$0xff]
    %v100 = vld [vmem:[#allocation5 + $0x30] sm:$0xff]
    %v101 = vld [vmem:[#allocation5 + $0x38] sm:$0xff]
    %v102 = vld [vmem:[#allocation5 + $0x40] sm:$0xff]
    %v103 = vld [vmem:[#allocation5 + $0x48] sm:$0xff]
    %v104 = vld [vmem:[#allocation5 + $0x50] sm:$0xff]
    %v105 = vld [vmem:[#allocation5 + $0x58] sm:$0xff]
    %v106 = vld [vmem:[#allocation5 + $0x60] sm:$0xff]
    %v107 = vld [vmem:[#allocation5 + $0x68] sm:$0xff]
    %v108 = vld [vmem:[#allocation5 + $0x70] sm:$0xff]
    %v109 = vld [vmem:[#allocation5 + $0x78] sm:$0xff]
    %v110 = vld [vmem:[%s4] sm:$0x1]
    %v112 = vperm.slane %v110, 0
    %114 = vmatpush.msra.mxu0 %v109
    %115 = vmatpush.msra.mxu0 %v108
    %116 = vmatpush.msra.mxu0 %v107
    %117 = vmatpush.msra.mxu0 %v106
    %118 = vmatpush.msra.mxu0 %v105
    %119 = vmatpush.msra.mxu0 %v104
    %120 = vmatpush.msra.mxu0 %v103
    %121 = vmatpush.msra.mxu0 %v102
    %122 = vmatpush.msra.mxu0 %v101
    %123 = vmatpush.msra.mxu0 %v100
    %124 = vmatpush.msra.mxu0 %v99
    %125 = vmatpush.msra.mxu0 %v98
    %126 = vmatpush.msra.mxu0 %v97
    %127 = vmatpush.msra.mxu0 %v96
    %128 = vmatpush.msra.mxu0 %v95
    %129 = vmatpush.msra.mxu0 %v94
    %130 = vmatmul.f32.gmra.mxu0 %v92
    %v131 = vpop.f32.mrf.mxu0
    %v132 = vadd.f32 %v112, %v131
    %133 = vdwg.mxu0
    %134 = vst [vmem:[#allocation7] sm:$0xff] %v132
    // Predicated region
    $region30: #{mlp_forward.1} parent=1 // pred_check
      _
    $region31: #{mlp_forward.1} parent=1 // pred_check_branch
      %136 = sbr.rel (0) target = $region33
    $region32: #{mlp_forward.1} parent=1 // pred_region
      %138 = vsyncadd [#allocation4], 0
      %s140 = sshll.u32 [#allocation7], 4
      %s141 = int_to_ptr.vmem [resolvable:$true] %s140
      %s142 = sshll.u32 %s5, 4
      %s143 = int_to_ptr.hbm [resolvable:$true] %s142
      %145 = dma.vmem_to_hbm [thread:$0]  %s141, 128, %s143, [#allocation4]
    $region33: #{mlp_forward.1} parent=1 // pred_fallthru
      _
    // Predicated region
    $region34: #{mlp_forward.1} parent=1 // pred_check
      _
    $region35: #{mlp_forward.1} parent=1 // pred_check_branch
      %147 = sbr.rel (0) target = $region37
    $region36: #{mlp_forward.1} parent=1 // pred_region
      %149 = dma.done [#allocation4], 128
    $region37: #{mlp_forward.1} parent=1 // pred_fallthru
      _
    %150 = vsyncpa [#allocation3], 1
    %151 = vsyncpa [#allocation6], 1
    %152 = vsyncpa [#allocation4], 1

</llo_original>
